<compile_context>
chip_gen: v7x
topology: tpu7x:2x2x1
jax: 0.10.0
libtpu: 0.0.40
codegen_flags: <defaults>
</compile_context>

<pallas_src>
from functools import partial

import jax
import jax.numpy as jnp
from jax.experimental import pallas as pl
from jax.experimental.pallas import tpu as pltpu


def hidden4_kernel(
    x_ref,
    w1_ref, t1_ref,
    w2_ref, t2_ref,
    w3_ref, t3_ref,
    w4_ref, t4_ref,
    w5_ref, t5_ref,
    o_ref,
):
    # Transposed layout: h is (features, tile_b); batch lives on the lane axis.
    h = x_ref[...]                                   # bf16 (num_input, tile_b)

    def hidden_layer(h, w_ref, t_ref):
        # bf16 x bf16 -> f32 accumulate on the MXU: (dout,din)@(din,tile_b).
        z = jnp.dot(w_ref[...], h, preferred_element_type=jnp.float32)
        z = z + t_ref[...]                           # folded-BN shift, f32 (dout,1) bcast
        z = jnp.maximum(z, 0.0)                      # ReLU in f32
        return z.astype(jnp.bfloat16)                # bf16 operand for next MXU pass

    h = hidden_layer(h, w1_ref, t1_ref)              # Dropout: identity at eval time
    h = hidden_layer(h, w2_ref, t2_ref)
    h = hidden_layer(h, w3_ref, t3_ref)
    h = hidden_layer(h, w4_ref, t4_ref)
    # Final Linear + bias + activation (ReLU), kept in f32 for the output.
    z = jnp.dot(w5_ref[...], h, preferred_element_type=jnp.float32)
    z = jnp.maximum(z + t5_ref[...], 0.0)
    o_ref[...] = z.astype(o_ref.dtype)


def make_params(num_input, num_output, neurons, key):
    """Deterministic synthetic parameters mirroring the nn.Module shapes.

    Returns per-layer (w, s, t): w is (din, dout); s/t are (1, dout) so the
    reference forward is  relu(h @ w * s + t)  (s = folded BN scale,
    t = folded BN shift; s = 1, t = bias for the last layer).
    """
    dims = [(num_input, neurons), (neurons, neurons), (neurons, neurons),
            (neurons, neurons), (neurons, num_output)]
    eps = 1e-5
    params = []
    keys = jax.random.split(key, len(dims) * 2)
    for i, (din, dout) in enumerate(dims):
        wk, bk = keys[2 * i], keys[2 * i + 1]
        bound = 1.0 / jnp.sqrt(jnp.float32(din))
        w = jax.random.uniform(wk, (din, dout), jnp.float32, -bound, bound)
        b = jax.random.uniform(bk, (dout,), jnp.float32, -bound, bound)
        if i < 4:
            # BatchNorm1d(neurons) in eval mode: deterministic affine + stats.
            idx = jnp.arange(dout, dtype=jnp.float32)
            gamma = 1.0 + 0.05 * jnp.sin(idx + i)
            beta = 0.02 * jnp.cos(idx - i)
            r_mean = 0.01 * idx / dout
            r_var = 1.0 + 0.1 * (idx % 4)
            s = gamma / jnp.sqrt(r_var + eps)            # per-feature scale
            t = (b - r_mean) * s + beta                  # per-feature shift
        else:
            s = jnp.ones((dout,), jnp.float32)
            t = b
        params.append((w, s.reshape(1, dout), t.reshape(1, dout)))
    return params


def fold_and_transpose(params):
    """Fold BN scale into weights, transpose to (dout, din), cast to bf16."""
    packed = []
    for (w, s, t) in params:
        wT = jnp.asarray((w * s).T, jnp.bfloat16)         # (dout, din) bf16 MXU operand
        tc = jnp.asarray(t.reshape(-1, 1), jnp.float32)   # (dout, 1)  f32 shift
        packed.append((wT, tc))
    return packed


@partial(jax.jit, static_argnames=("tile_b",))
def hidden4_net(x, params, tile_b=512):
    B, num_input = x.shape
    num_output = params[-1][0].shape[1]

    # Batch goes on the lane axis -> tile must be a multiple of 128.
    tile_b = max(128, (tile_b // 128) * 128)
    Bp = pl.cdiv(B, tile_b) * tile_b
    # (F, Bp) transposed, bf16 streamed input; pad is a no-op when B % tile_b == 0
    # and is fused away by XLA under jit otherwise.
    xT = jnp.pad(x.astype(jnp.bfloat16).T, ((0, 0), (0, Bp - B)))

    packed = fold_and_transpose(params)

    full = lambda i: (0, 0)  # weights/shifts are whole-array, VMEM-resident
    in_specs = [pl.BlockSpec((num_input, tile_b), lambda i: (0, i))]
    flat_params = []
    for (wT, tc) in packed:
        in_specs.append(pl.BlockSpec(wT.shape, full))
        in_specs.append(pl.BlockSpec(tc.shape, full))
        flat_params.extend([wT, tc])

    # Advisory cost hint so XLA can overlap this tiny call with neighbors.
    neurons = params[0][0].shape[1]
    flops = 2 * Bp * (num_input * neurons + 3 * neurons * neurons
                      + neurons * num_output)
    w_bytes = sum(int(w.size) * 2 + int(t.size) * 4 for (w, t) in packed)
    bytes_accessed = int(Bp * num_input * 2 + Bp * num_output * 4 + w_bytes)
    cost = pl.CostEstimate(flops=int(flops), transcendentals=0,
                           bytes_accessed=bytes_accessed)

    outT = pl.pallas_call(
        hidden4_kernel,
        out_shape=jax.ShapeDtypeStruct((num_output, Bp), jnp.float32),
        grid_spec=pltpu.PrefetchScalarGridSpec(
            num_scalar_prefetch=0,
            grid=(Bp // tile_b,),
            in_specs=in_specs,
            # Lane-dense output: (1, tile_b) block, batch on the lane axis.
            out_specs=pl.BlockSpec((num_output, tile_b), lambda i: (0, i)),
        ),
        compiler_params=pltpu.CompilerParams(
            dimension_semantics=("parallel",)),
        cost_estimate=cost,
    )(xT, *flat_params)

    # Back to the PyTorch (B, num_output) layout; drop padded batch columns.
    return outT.T[:B]


def hidden4_ref(x, params):
    """Reference that mimics the kernel's numerics: bf16 MXU operands,
    f32 accumulation, f32 shift/ReLU; final layer output left in f32."""
    nlayers = len(params)
    h = x.astype(jnp.bfloat16)
    for i, (w, s, t) in enumerate(params):
        wf = (w * s).astype(jnp.bfloat16)
        z = jnp.dot(h.astype(jnp.float32), wf.astype(jnp.float32)) + t
        h = jnp.maximum(z, 0.0)
        if i < nlayers - 1:
            h = h.astype(jnp.bfloat16)
    return h.astype(jnp.float32)


if __name__ == "__main__":
    num_input, num_output, neurons = 4, 1, 32
    B = 1024          # mirrors the script's n=1000 stacked feature rows
    tile_b = 512      # grid = 2 parallel steps (keeps both v7x TCs busy,
                      # only 2 cheap steps on single-TC v5e/v6e)

    key = jax.random.PRNGKey(0)
    k_in, k_p = jax.random.split(key)

    # Input mimics the script's stacked (scaled_price, tau, sigma, r) features.
    scaled_price = jnp.linspace(0.4, 1.6, B, dtype=jnp.float32)
    tau = jnp.linspace(0.2, 1.1, B, dtype=jnp.float32)
    sigma = jnp.linspace(0.01, 1.0, B, dtype=jnp.float32)
    r = jnp.linspace(0.02, 0.1, B, dtype=jnp.float32)
    x = jnp.stack((scaled_price, tau, sigma, r), axis=-1)
    x = x + 0.01 * jax.random.normal(k_in, x.shape, jnp.float32)

    params = make_params(num_input, num_output, neurons, k_p)

    # TODO(synk): Dropout masks / BatchNorm batch-statistics (training mode)
    # are not implemented; this kernel is eval-mode (running stats, no dropout).
    out = hidden4_net(x, params, tile_b=tile_b)
    out = jax.block_until_ready(out)

    ref = hidden4_ref(x, params)
    assert out.shape == (B, num_output)
    # Tolerance accounts only for f32 accumulation-order differences; the
    # bf16 operand quantization is mirrored in hidden4_ref.
    assert jnp.allclose(out, ref, atol=1e-2, rtol=1e-2)

    print("KERNEL_OK")
</pallas_src>

<mosaic_0001>
module attributes {stable_mosaic.version = 11 : i64} {
  func.func @hidden4_kernel(%arg0: i32, %arg1: memref<4x512xbf16, #tpu.memory_space<vmem>>, %arg2: memref<32x4xbf16, #tpu.memory_space<vmem>>, %arg3: memref<32x1xf32, #tpu.memory_space<vmem>>, %arg4: memref<32x32xbf16, #tpu.memory_space<vmem>>, %arg5: memref<32x1xf32, #tpu.memory_space<vmem>>, %arg6: memref<32x32xbf16, #tpu.memory_space<vmem>>, %arg7: memref<32x1xf32, #tpu.memory_space<vmem>>, %arg8: memref<32x32xbf16, #tpu.memory_space<vmem>>, %arg9: memref<32x1xf32, #tpu.memory_space<vmem>>, %arg10: memref<1x32xbf16, #tpu.memory_space<vmem>>, %arg11: memref<1x1xf32, #tpu.memory_space<vmem>>, %arg12: memref<1x512xf32, #tpu.memory_space<vmem>>) attributes {dimension_semantics = [#tpu.dimension_semantics<parallel>], iteration_bounds = array<i64: 2>, scalar_prefetch = 0 : i64, scratch_operands = 0 : i64, tpu.core_type = #tpu.core_type<tc>, window_params = [{transform_indices = @transform_0, window_bounds = array<i64: 4, 512>}, {pipeline_mode = #tpu.pipeline_mode<synchronous>, transform_indices = @transform_1, window_bounds = array<i64: 32, 4>}, {pipeline_mode = #tpu.pipeline_mode<synchronous>, transform_indices = @transform_2, window_bounds = array<i64: 32, 1>}, {pipeline_mode = #tpu.pipeline_mode<synchronous>, transform_indices = @transform_3, window_bounds = array<i64: 32, 32>}, {pipeline_mode = #tpu.pipeline_mode<synchronous>, transform_indices = @transform_4, window_bounds = array<i64: 32, 1>}, {pipeline_mode = #tpu.pipeline_mode<synchronous>, transform_indices = @transform_5, window_bounds = array<i64: 32, 32>}, {pipeline_mode = #tpu.pipeline_mode<synchronous>, transform_indices = @transform_6, window_bounds = array<i64: 32, 1>}, {pipeline_mode = #tpu.pipeline_mode<synchronous>, transform_indices = @transform_7, window_bounds = array<i64: 32, 32>}, {pipeline_mode = #tpu.pipeline_mode<synchronous>, transform_indices = @transform_8, window_bounds = array<i64: 32, 1>}, {pipeline_mode = #tpu.pipeline_mode<synchronous>, transform_indices = @transform_9, window_bounds = array<i64: 1, 32>}, {pipeline_mode = #tpu.pipeline_mode<synchronous>, transform_indices = @transform_10, window_bounds = array<i64: 1, 1>}, {transform_indices = @transform_11, window_bounds = array<i64: 1, 512>}]} {
    %c0 = arith.constant 0 : index
    %c0_0 = arith.constant 0 : index
    %0 = vector.load %arg1[%c0, %c0_0] : memref<4x512xbf16, #tpu.memory_space<vmem>>, vector<4x512xbf16>
    %c0_1 = arith.constant 0 : index
    %c0_2 = arith.constant 0 : index
    %1 = vector.load %arg2[%c0_1, %c0_2] : memref<32x4xbf16, #tpu.memory_space<vmem>>, vector<32x4xbf16>
    %cst = arith.constant dense<0.000000e+00> : vector<32x512xf32>
    %2 = tpu.matmul %1, %0, %cst {dimension_numbers = #tpu.dot_dimension_numbers<[1], [0], [0], [1], [0, 0, 1, 1], [], []>} : vector<32x4xbf16>, vector<4x512xbf16>, vector<32x512xf32> -> vector<32x512xf32>
    %c0_3 = arith.constant 0 : index
    %c0_4 = arith.constant 0 : index
    %3 = vector.load %arg3[%c0_3, %c0_4] : memref<32x1xf32, #tpu.memory_space<vmem>>, vector<32x1xf32>
    %4 = vector.broadcast %3 : vector<32x1xf32> to vector<32x512xf32>
    %5 = arith.addf %2, %4 : vector<32x512xf32>
    %cst_5 = arith.constant 0.000000e+00 : f32
    %6 = vector.broadcast %cst_5 : f32 to vector<32x512xf32>
    %7 = arith.maximumf %5, %6 : vector<32x512xf32>
    %8 = arith.truncf %7 : vector<32x512xf32> to vector<32x512xbf16>
    %c0_6 = arith.constant 0 : index
    %c0_7 = arith.constant 0 : index
    %9 = vector.load %arg4[%c0_6, %c0_7] : memref<32x32xbf16, #tpu.memory_space<vmem>>, vector<32x32xbf16>
    %cst_8 = arith.constant dense<0.000000e+00> : vector<32x512xf32>
    %10 = tpu.matmul %9, %8, %cst_8 {dimension_numbers = #tpu.dot_dimension_numbers<[1], [0], [0], [1], [0, 0, 1, 1], [], []>} : vector<32x32xbf16>, vector<32x512xbf16>, vector<32x512xf32> -> vector<32x512xf32>
    %c0_9 = arith.constant 0 : index
    %c0_10 = arith.constant 0 : index
    %11 = vector.load %arg5[%c0_9, %c0_10] : memref<32x1xf32, #tpu.memory_space<vmem>>, vector<32x1xf32>
    %12 = vector.broadcast %11 : vector<32x1xf32> to vector<32x512xf32>
    %13 = arith.addf %10, %12 : vector<32x512xf32>
    %cst_11 = arith.constant 0.000000e+00 : f32
    %14 = vector.broadcast %cst_11 : f32 to vector<32x512xf32>
    %15 = arith.maximumf %13, %14 : vector<32x512xf32>
    %16 = arith.truncf %15 : vector<32x512xf32> to vector<32x512xbf16>
    %c0_12 = arith.constant 0 : index
    %c0_13 = arith.constant 0 : index
    %17 = vector.load %arg6[%c0_12, %c0_13] : memref<32x32xbf16, #tpu.memory_space<vmem>>, vector<32x32xbf16>
    %cst_14 = arith.constant dense<0.000000e+00> : vector<32x512xf32>
    %18 = tpu.matmul %17, %16, %cst_14 {dimension_numbers = #tpu.dot_dimension_numbers<[1], [0], [0], [1], [0, 0, 1, 1], [], []>} : vector<32x32xbf16>, vector<32x512xbf16>, vector<32x512xf32> -> vector<32x512xf32>
    %c0_15 = arith.constant 0 : index
    %c0_16 = arith.constant 0 : index
    %19 = vector.load %arg7[%c0_15, %c0_16] : memref<32x1xf32, #tpu.memory_space<vmem>>, vector<32x1xf32>
    %20 = vector.broadcast %19 : vector<32x1xf32> to vector<32x512xf32>
    %21 = arith.addf %18, %20 : vector<32x512xf32>
    %cst_17 = arith.constant 0.000000e+00 : f32
    %22 = vector.broadcast %cst_17 : f32 to vector<32x512xf32>
    %23 = arith.maximumf %21, %22 : vector<32x512xf32>
    %24 = arith.truncf %23 : vector<32x512xf32> to vector<32x512xbf16>
    %c0_18 = arith.constant 0 : index
    %c0_19 = arith.constant 0 : index
    %25 = vector.load %arg8[%c0_18, %c0_19] : memref<32x32xbf16, #tpu.memory_space<vmem>>, vector<32x32xbf16>
    %cst_20 = arith.constant dense<0.000000e+00> : vector<32x512xf32>
    %26 = tpu.matmul %25, %24, %cst_20 {dimension_numbers = #tpu.dot_dimension_numbers<[1], [0], [0], [1], [0, 0, 1, 1], [], []>} : vector<32x32xbf16>, vector<32x512xbf16>, vector<32x512xf32> -> vector<32x512xf32>
    %c0_21 = arith.constant 0 : index
    %c0_22 = arith.constant 0 : index
    %27 = vector.load %arg9[%c0_21, %c0_22] : memref<32x1xf32, #tpu.memory_space<vmem>>, vector<32x1xf32>
    %28 = vector.broadcast %27 : vector<32x1xf32> to vector<32x512xf32>
    %29 = arith.addf %26, %28 : vector<32x512xf32>
    %cst_23 = arith.constant 0.000000e+00 : f32
    %30 = vector.broadcast %cst_23 : f32 to vector<32x512xf32>
    %31 = arith.maximumf %29, %30 : vector<32x512xf32>
    %32 = arith.truncf %31 : vector<32x512xf32> to vector<32x512xbf16>
    %c0_24 = arith.constant 0 : index
    %c0_25 = arith.constant 0 : index
    %33 = vector.load %arg10[%c0_24, %c0_25] : memref<1x32xbf16, #tpu.memory_space<vmem>>, vector<1x32xbf16>
    %cst_26 = arith.constant dense<0.000000e+00> : vector<1x512xf32>
    %34 = tpu.matmul %33, %32, %cst_26 {dimension_numbers = #tpu.dot_dimension_numbers<[1], [0], [0], [1], [0, 0, 1, 1], [], []>} : vector<1x32xbf16>, vector<32x512xbf16>, vector<1x512xf32> -> vector<1x512xf32>
    %c0_27 = arith.constant 0 : index
    %c0_28 = arith.constant 0 : index
    %35 = vector.load %arg11[%c0_27, %c0_28] : memref<1x1xf32, #tpu.memory_space<vmem>>, vector<1x1xf32>
    %36 = vector.broadcast %35 : vector<1x1xf32> to vector<1x512xf32>
    %37 = arith.addf %34, %36 : vector<1x512xf32>
    %cst_29 = arith.constant 0.000000e+00 : f32
    %38 = vector.broadcast %cst_29 : f32 to vector<1x512xf32>
    %39 = arith.maximumf %37, %38 : vector<1x512xf32>
    %c0_30 = arith.constant 0 : index
    %c0_31 = arith.constant 0 : index
    %40 = vector.load %arg12[%c0_30, %c0_31] : memref<1x512xf32, #tpu.memory_space<vmem>>, vector<1x512xf32>
    tpu.vector_store %arg12[%c0_30, %c0_31], %39 {strides = array<i32>} : memref<1x512xf32, #tpu.memory_space<vmem>>, vector<1x512xf32>,
    return
  }
  func.func @transform_0(%arg0: i32) -> (i32, i32) {
    %c0_i32 = arith.constant 0 : i32
    %c0_i32_0 = arith.constant 0 : i32
    return %c0_i32, %arg0 : i32, i32
  }
  func.func @transform_1(%arg0: i32) -> (i32, i32) {
    %c0_i32 = arith.constant 0 : i32
    %c0_i32_0 = arith.constant 0 : i32
    %c0_i32_1 = arith.constant 0 : i32
    return %c0_i32, %c0_i32_0 : i32, i32
  }
  func.func @transform_2(%arg0: i32) -> (i32, i32) {
    %c0_i32 = arith.constant 0 : i32
    %c0_i32_0 = arith.constant 0 : i32
    %c0_i32_1 = arith.constant 0 : i32
    return %c0_i32, %c0_i32_0 : i32, i32
  }
  func.func @transform_3(%arg0: i32) -> (i32, i32) {
    %c0_i32 = arith.constant 0 : i32
    %c0_i32_0 = arith.constant 0 : i32
    %c0_i32_1 = arith.constant 0 : i32
    return %c0_i32, %c0_i32_0 : i32, i32
  }
  func.func @transform_4(%arg0: i32) -> (i32, i32) {
    %c0_i32 = arith.constant 0 : i32
    %c0_i32_0 = arith.constant 0 : i32
    %c0_i32_1 = arith.constant 0 : i32
    return %c0_i32, %c0_i32_0 : i32, i32
  }
  func.func @transform_5(%arg0: i32) -> (i32, i32) {
    %c0_i32 = arith.constant 0 : i32
    %c0_i32_0 = arith.constant 0 : i32
    %c0_i32_1 = arith.constant 0 : i32
    return %c0_i32, %c0_i32_0 : i32, i32
  }
  func.func @transform_6(%arg0: i32) -> (i32, i32) {
    %c0_i32 = arith.constant 0 : i32
    %c0_i32_0 = arith.constant 0 : i32
    %c0_i32_1 = arith.constant 0 : i32
    return %c0_i32, %c0_i32_0 : i32, i32
  }
  func.func @transform_7(%arg0: i32) -> (i32, i32) {
    %c0_i32 = arith.constant 0 : i32
    %c0_i32_0 = arith.constant 0 : i32
    %c0_i32_1 = arith.constant 0 : i32
    return %c0_i32, %c0_i32_0 : i32, i32
  }
  func.func @transform_8(%arg0: i32) -> (i32, i32) {
    %c0_i32 = arith.constant 0 : i32
    %c0_i32_0 = arith.constant 0 : i32
    %c0_i32_1 = arith.constant 0 : i32
    return %c0_i32, %c0_i32_0 : i32, i32
  }
  func.func @transform_9(%arg0: i32) -> (i32, i32) {
    %c0_i32 = arith.constant 0 : i32
    %c0_i32_0 = arith.constant 0 : i32
    %c0_i32_1 = arith.constant 0 : i32
    return %c0_i32, %c0_i32_0 : i32, i32
  }
  func.func @transform_10(%arg0: i32) -> (i32, i32) {
    %c0_i32 = arith.constant 0 : i32
    %c0_i32_0 = arith.constant 0 : i32
    %c0_i32_1 = arith.constant 0 : i32
    return %c0_i32, %c0_i32_0 : i32, i32
  }
  func.func @transform_11(%arg0: i32) -> (i32, i32) {
    %c0_i32 = arith.constant 0 : i32
    %c0_i32_0 = arith.constant 0 : i32
    return %c0_i32, %arg0 : i32, i32
  }
}

</mosaic_0001>

<llo_original>
// kernel: hidden4_net.1
$region0: #{hidden4_net.1}
  #allocation0 [shape = 'u32[]', space=smem, size = 0x4, offset = 0x4, fixed_abs, tag = 'smem constant byte address 0x4 - core index']
  #allocation1 [shape = 'u32[144,128]{1,0:T(1,128)}', space=vmem, size = 0x12000, scoped, tag = 'internal scratch']
  #allocation2 [shape = 'f32[1,1]{1,0:T(1,128)S(1)}', space=vmem, size = 0x200, scoped, tag = 'scoped memory for hidden4_net.1']
  %s0 = inlined_call_operand.vmem [shape: bf16[4,1024], index: 0, kind: input, shape index: {}]
  %s1 = inlined_call_operand.vmem [shape: bf16[32,4], index: 1, kind: input, shape index: {}]
  %s2 = inlined_call_operand.vmem [shape: f32[32,1], index: 2, kind: input, shape index: {}]
  %s3 = inlined_call_operand.vmem [shape: bf16[32,32], index: 3, kind: input, shape index: {}]
  %s4 = inlined_call_operand.vmem [shape: f32[32,1], index: 4, kind: input, shape index: {}]
  %s5 = inlined_call_operand.vmem [shape: bf16[32,32], index: 5, kind: input, shape index: {}]
  %s6 = inlined_call_operand.vmem [shape: f32[32,1], index: 6, kind: input, shape index: {}]
  %s7 = inlined_call_operand.vmem [shape: bf16[32,32], index: 7, kind: input, shape index: {}]
  %s8 = inlined_call_operand.vmem [shape: f32[32,1], index: 8, kind: input, shape index: {}]
  %s9 = inlined_call_operand.vmem [shape: bf16[1,32], index: 9, kind: input, shape index: {}]
  %s10 = inlined_call_operand.<no memory space> [shape: f32[1,1], index: 10, kind: input, shape index: {}]
  %s11 = inlined_call_operand.hbm [shape: f32[1,1024], index: 11, kind: output, shape index: {}]
  %s12 = sld [smem:[#allocation0]]
  $region77: #{hidden4_net.1} parent=0
    _
  %s14 = ssub.s32 1, %s12
  %s15 = scalar_select 0, %s14, %s12
  %v16 = vstv %s10
  %17 = vst [vmem:[#allocation2] sm:$0x1] %v16
  $region1: #{hidden4_net.1} parent=0
    #allocation3 [shape = 'u8[4096]{0}', space=vmem, size = 0x1000, scoped, tag = 'output window, operand 0']
    #allocation4 [shape = 's32[2]{0}', space=sflag, size = 0x8, scoped, tag = 'scoped memory for hidden4_net.1']
    %18 = vsyncpa [#allocation4], 0
    %s19 = scalar_lea.sflag [#allocation4], 1
    %20 = vsyncpa %s19, 0
    loop: start=0, step=1, limit=4
    $region2: #{hidden4_net.1} parent=1 // loop_pre_header
      _
    $region3: #{hidden4_net.1} parent=1 // loop_header
      %s22 = sphi 0, %s26
      %p23 = scmp.ge.s32.totalorder %s22, 4
      %s32 = sphi 0, %s34
      %s35 = sphi 0, %s32
      %s36 = sphi 0, %s35
      %s52 = sphi 0, %s36
      %s56 = sphi 0, %s56
      %s58 = sphi 0, %s56
      %s59 = sphi 0, %s58
      %s73 = sphi 0, %s59
      %s77 = sphi 0, %s77
      %s79 = sphi 0, %s77
      %s80 = sphi 0, %s79
      %s94 = sphi 0, %s80
      %s98 = sphi 0, %s98
      %s100 = sphi 0, %s98
      %s101 = sphi 0, %s100
      %s115 = sphi 0, %s101
      %s119 = sphi 0, %s119
      %s121 = sphi 0, %s119
      %s122 = sphi 0, %s121
      %s136 = sphi 0, %s122
      %s140 = sphi 0, %s140
      %s142 = sphi 0, %s140
      %s143 = sphi 0, %s142
      %s157 = sphi 0, %s143
      %s161 = sphi 0, %s161
      %s163 = sphi 0, %s161
      %s164 = sphi 0, %s163
      %s178 = sphi 0, %s164
      %s182 = sphi 0, %s182
      %s184 = sphi 0, %s182
      %s185 = sphi 0, %s184
      %s199 = sphi 0, %s185
      %s203 = sphi 0, %s203
      %s205 = sphi 0, %s203
      %s206 = sphi 0, %s205
      %s220 = sphi 0, %s206
      %s224 = sphi 0, %s224
      %s226 = sphi 0, %s224
      %s227 = sphi 0, %s226
      %s241 = sphi 0, %s227
      %s245 = sphi 0, %s245
      %s247 = sphi 0, %s245
      %s248 = sphi 0, %s247
      %s262 = sphi 0, %s248
      %s268 = sphi 0, %s270
      %s271 = sphi 0, %s268
      %s272 = sphi 0, %s271
      %s288 = sphi 0, %s272
    $region4: #{hidden4_net.1} parent=1 // loop_header_branch
      %25 = sbr.rel (%p23) target = $region8
    $region5: #{hidden4_net.1} parent=1 // loop_body
      %s27 = ssub.s32 %s22, 1
      %s28 = ssub.s32 %s22, 2
      %s29 = sadd.s32 %s22, 1
      %s30 = ssub.s32 %s22, %s29
      %p31 = scmp.eq.s32.totalorder %s30, 0
      %s33 = sadd.s32 %s32, 1
      %s34 = scalar_select %p31, %s32, %s33
      %p37 = pneg %p31
      %p38 = scmp.eq.s32.totalorder %s22, 1
      %p39 = por %p37, %p38
      %p40 = scmp.ne.s32.totalorder %s32, %s35
      %p41 = scmp.eq.s32.totalorder %s22, 0
      %p42 = por %p40, %p41
      %p43 = scmp.ne.s32.totalorder %s32, %s35
      %p44 = scmp.eq.s32.totalorder %s27, 1
      %p45 = por %p43, %p44
      %p46 = scmp.ne.s32.totalorder %s35, %s36
      %p47 = scmp.eq.s32.totalorder %s27, 0
      %p48 = por %p46, %p47
      %p49 = scmp.ne.s32.totalorder %s35, %s36
      %p50 = scmp.eq.s32.totalorder %s28, 1
      %p51 = por %p49, %p50
      %p53 = scmp.ne.s32.totalorder %s36, %s52
      %p54 = scmp.eq.s32.totalorder %s28, 0
      %p55 = por %p53, %p54
      %s57 = sadd.s32 %s56, 1
      %p60 = scmp.eq.s32.totalorder %s22, 1
      %p61 = scmp.ne.s32.totalorder %s56, %s58
      %p62 = scmp.eq.s32.totalorder %s22, 0
      %p63 = por %p61, %p62
      %p64 = scmp.ne.s32.totalorder %s56, %s58
      %p65 = scmp.eq.s32.totalorder %s27, 1
      %p66 = por %p64, %p65
      %p67 = scmp.ne.s32.totalorder %s58, %s59
      %p68 = scmp.eq.s32.totalorder %s27, 0
      %p69 = por %p67, %p68
      %p70 = scmp.ne.s32.totalorder %s58, %s59
      %p71 = scmp.eq.s32.totalorder %s28, 1
      %p72 = por %p70, %p71
      %p74 = scmp.ne.s32.totalorder %s59, %s73
      %p75 = scmp.eq.s32.totalorder %s28, 0
      %p76 = por %p74, %p75
      %s78 = sadd.s32 %s77, 1
      %p81 = scmp.eq.s32.totalorder %s22, 1
      %p82 = scmp.ne.s32.totalorder %s77, %s79
      %p83 = scmp.eq.s32.totalorder %s22, 0
      %p84 = por %p82, %p83
      %p85 = scmp.ne.s32.totalorder %s77, %s79
      %p86 = scmp.eq.s32.totalorder %s27, 1
      %p87 = por %p85, %p86
      %p88 = scmp.ne.s32.totalorder %s79, %s80
      %p89 = scmp.eq.s32.totalorder %s27, 0
      %p90 = por %p88, %p89
      %p91 = scmp.ne.s32.totalorder %s79, %s80
      %p92 = scmp.eq.s32.totalorder %s28, 1
      %p93 = por %p91, %p92
      %p95 = scmp.ne.s32.totalorder %s80, %s94
      %p96 = scmp.eq.s32.totalorder %s28, 0
      %p97 = por %p95, %p96
      %s99 = sadd.s32 %s98, 1
      %p102 = scmp.eq.s32.totalorder %s22, 1
      %p103 = scmp.ne.s32.totalorder %s98, %s100
      %p104 = scmp.eq.s32.totalorder %s22, 0
      %p105 = por %p103, %p104
      %p106 = scmp.ne.s32.totalorder %s98, %s100
      %p107 = scmp.eq.s32.totalorder %s27, 1
      %p108 = por %p106, %p107
      %p109 = scmp.ne.s32.totalorder %s100, %s101
      %p110 = scmp.eq.s32.totalorder %s27, 0
      %p111 = por %p109, %p110
      %p112 = scmp.ne.s32.totalorder %s100, %s101
      %p113 = scmp.eq.s32.totalorder %s28, 1
      %p114 = por %p112, %p113
      %p116 = scmp.ne.s32.totalorder %s101, %s115
      %p117 = scmp.eq.s32.totalorder %s28, 0
      %p118 = por %p116, %p117
      %s120 = sadd.s32 %s119, 1
      %p123 = scmp.eq.s32.totalorder %s22, 1
      %p124 = scmp.ne.s32.totalorder %s119, %s121
      %p125 = scmp.eq.s32.totalorder %s22, 0
      %p126 = por %p124, %p125
      %p127 = scmp.ne.s32.totalorder %s119, %s121
      %p128 = scmp.eq.s32.totalorder %s27, 1
      %p129 = por %p127, %p128
      %p130 = scmp.ne.s32.totalorder %s121, %s122
      %p131 = scmp.eq.s32.totalorder %s27, 0
      %p132 = por %p130, %p131
      %p133 = scmp.ne.s32.totalorder %s121, %s122
      %p134 = scmp.eq.s32.totalorder %s28, 1
      %p135 = por %p133, %p134
      %p137 = scmp.ne.s32.totalorder %s122, %s136
      %p138 = scmp.eq.s32.totalorder %s28, 0
      %p139 = por %p137, %p138
      %s141 = sadd.s32 %s140, 1
      %p144 = scmp.eq.s32.totalorder %s22, 1
      %p145 = scmp.ne.s32.totalorder %s140, %s142
      %p146 = scmp.eq.s32.totalorder %s22, 0
      %p147 = por %p145, %p146
      %p148 = scmp.ne.s32.totalorder %s140, %s142
      %p149 = scmp.eq.s32.totalorder %s27, 1
      %p150 = por %p148, %p149
      %p151 = scmp.ne.s32.totalorder %s142, %s143
      %p152 = scmp.eq.s32.totalorder %s27, 0
      %p153 = por %p151, %p152
      %p154 = scmp.ne.s32.totalorder %s142, %s143
      %p155 = scmp.eq.s32.totalorder %s28, 1
      %p156 = por %p154, %p155
      %p158 = scmp.ne.s32.totalorder %s143, %s157
      %p159 = scmp.eq.s32.totalorder %s28, 0
      %p160 = por %p158, %p159
      %s162 = sadd.s32 %s161, 1
      %p165 = scmp.eq.s32.totalorder %s22, 1
      %p166 = scmp.ne.s32.totalorder %s161, %s163
      %p167 = scmp.eq.s32.totalorder %s22, 0
      %p168 = por %p166, %p167
      %p169 = scmp.ne.s32.totalorder %s161, %s163
      %p170 = scmp.eq.s32.totalorder %s27, 1
      %p171 = por %p169, %p170
      %p172 = scmp.ne.s32.totalorder %s163, %s164
      %p173 = scmp.eq.s32.totalorder %s27, 0
      %p174 = por %p172, %p173
      %p175 = scmp.ne.s32.totalorder %s163, %s164
      %p176 = scmp.eq.s32.totalorder %s28, 1
      %p177 = por %p175, %p176
      %p179 = scmp.ne.s32.totalorder %s164, %s178
      %p180 = scmp.eq.s32.totalorder %s28, 0
      %p181 = por %p179, %p180
      %s183 = sadd.s32 %s182, 1
      %p186 = scmp.eq.s32.totalorder %s22, 1
      %p187 = scmp.ne.s32.totalorder %s182, %s184
      %p188 = scmp.eq.s32.totalorder %s22, 0
      %p189 = por %p187, %p188
      %p190 = scmp.ne.s32.totalorder %s182, %s184
      %p191 = scmp.eq.s32.totalorder %s27, 1
      %p192 = por %p190, %p191
      %p193 = scmp.ne.s32.totalorder %s184, %s185
      %p194 = scmp.eq.s32.totalorder %s27, 0
      %p195 = por %p193, %p194
      %p196 = scmp.ne.s32.totalorder %s184, %s185
      %p197 = scmp.eq.s32.totalorder %s28, 1
      %p198 = por %p196, %p197
      %p200 = scmp.ne.s32.totalorder %s185, %s199
      %p201 = scmp.eq.s32.totalorder %s28, 0
      %p202 = por %p200, %p201
      %s204 = sadd.s32 %s203, 1
      %p207 = scmp.eq.s32.totalorder %s22, 1
      %p208 = scmp.ne.s32.totalorder %s203, %s205
      %p209 = scmp.eq.s32.totalorder %s22, 0
      %p210 = por %p208, %p209
      %p211 = scmp.ne.s32.totalorder %s203, %s205
      %p212 = scmp.eq.s32.totalorder %s27, 1
      %p213 = por %p211, %p212
      %p214 = scmp.ne.s32.totalorder %s205, %s206
      %p215 = scmp.eq.s32.totalorder %s27, 0
      %p216 = por %p214, %p215
      %p217 = scmp.ne.s32.totalorder %s205, %s206
      %p218 = scmp.eq.s32.totalorder %s28, 1
      %p219 = por %p217, %p218
      %p221 = scmp.ne.s32.totalorder %s206, %s220
      %p222 = scmp.eq.s32.totalorder %s28, 0
      %p223 = por %p221, %p222
      %s225 = sadd.s32 %s224, 1
      %p228 = scmp.eq.s32.totalorder %s22, 1
      %p229 = scmp.ne.s32.totalorder %s224, %s226
      %p230 = scmp.eq.s32.totalorder %s22, 0
      %p231 = por %p229, %p230
      %p232 = scmp.ne.s32.totalorder %s224, %s226
      %p233 = scmp.eq.s32.totalorder %s27, 1
      %p234 = por %p232, %p233
      %p235 = scmp.ne.s32.totalorder %s226, %s227
      %p236 = scmp.eq.s32.totalorder %s27, 0
      %p237 = por %p235, %p236
      %p238 = scmp.ne.s32.totalorder %s226, %s227
      %p239 = scmp.eq.s32.totalorder %s28, 1
      %p240 = por %p238, %p239
      %p242 = scmp.ne.s32.totalorder %s227, %s241
      %p243 = scmp.eq.s32.totalorder %s28, 0
      %p244 = por %p242, %p243
      %s246 = sadd.s32 %s245, 1
      %p249 = scmp.eq.s32.totalorder %s22, 1
      %p250 = scmp.ne.s32.totalorder %s245, %s247
      %p251 = scmp.eq.s32.totalorder %s22, 0
      %p252 = por %p250, %p251
      %p253 = scmp.ne.s32.totalorder %s245, %s247
      %p254 = scmp.eq.s32.totalorder %s27, 1
      %p255 = por %p253, %p254
      %p256 = scmp.ne.s32.totalorder %s247, %s248
      %p257 = scmp.eq.s32.totalorder %s27, 0
      %p258 = por %p256, %p257
      %p259 = scmp.ne.s32.totalorder %s247, %s248
      %p260 = scmp.eq.s32.totalorder %s28, 1
      %p261 = por %p259, %p260
      %p263 = scmp.ne.s32.totalorder %s248, %s262
      %p264 = scmp.eq.s32.totalorder %s28, 0
      %p265 = por %p263, %p264
      %s266 = ssub.s32 %s22, %s29
      %p267 = scmp.eq.s32.totalorder %s266, 0
      %s269 = sadd.s32 %s268, 1
      %s270 = scalar_select %p267, %s268, %s269
      %p273 = pneg %p267
      %p274 = scmp.eq.s32.totalorder %s22, 1
      %p275 = por %p273, %p274
      %p276 = scmp.ne.s32.totalorder %s268, %s271
      %p277 = scmp.eq.s32.totalorder %s22, 0
      %p278 = por %p276, %p277
      %p279 = scmp.ne.s32.totalorder %s268, %s271
      %p280 = scmp.eq.s32.totalorder %s27, 1
      %p281 = por %p279, %p280
      %p282 = scmp.ne.s32.totalorder %s271, %s272
      %p283 = scmp.eq.s32.totalorder %s27, 0
      %p284 = por %p282, %p283
      %p285 = scmp.ne.s32.totalorder %s271, %s272
      %p286 = scmp.eq.s32.totalorder %s28, 1
      %p287 = por %p285, %p286
      %p289 = scmp.ne.s32.totalorder %s272, %s288
      %p290 = scmp.eq.s32.totalorder %s28, 0
      %p291 = por %p289, %p290
      %p292 = scmp.le.s32.totalorder 1, %s22
      %p293 = scmp.lt.s32.totalorder %s22, 3
      %p294 = pnand %p292, %p293
      %p295 = pneg %p294
      // Predicated region
      $region9: #{hidden4_net.1} parent=5 // pred_check
        _
      $region10: #{hidden4_net.1} parent=5 // pred_check_branch
        %297 = sbr.rel (%p294) target = $region12
      $region11: #{hidden4_net.1} parent=5 // pred_region
        %s298 = ssub.s32 %s22, 1
        // Predicated region
        $region13: #{hidden4_net.1} parent=11 // pred_check
          %p299 = pneg %p69
        $region14: #{hidden4_net.1} parent=11 // pred_check_branch
          %301 = sbr.rel (%p299) target = $region16
        $region15: #{hidden4_net.1} parent=11 // pred_region
          _
        $region16: #{hidden4_net.1} parent=11 // pred_fallthru
          _
        // Predicated region
        $region17: #{hidden4_net.1} parent=11 // pred_check
          %p302 = pneg %p90
        $region18: #{hidden4_net.1} parent=11 // pred_check_branch
          %304 = sbr.rel (%p302) target = $region20
        $region19: #{hidden4_net.1} parent=11 // pred_region
          _
        $region20: #{hidden4_net.1} parent=11 // pred_fallthru
          _
        // Predicated region
        $region21: #{hidden4_net.1} parent=11 // pred_check
          %p305 = pneg %p111
        $region22: #{hidden4_net.1} parent=11 // pred_check_branch
          %307 = sbr.rel (%p305) target = $region24
        $region23: #{hidden4_net.1} parent=11 // pred_region
          _
        $region24: #{hidden4_net.1} parent=11 // pred_fallthru
          _
        // Predicated region
        $region25: #{hidden4_net.1} parent=11 // pred_check
          %p308 = pneg %p132
        $region26: #{hidden4_net.1} parent=11 // pred_check_branch
          %310 = sbr.rel (%p308) target = $region28
        $region27: #{hidden4_net.1} parent=11 // pred_region
          _
        $region28: #{hidden4_net.1} parent=11 // pred_fallthru
          _
        // Predicated region
        $region29: #{hidden4_net.1} parent=11 // pred_check
          %p311 = pneg %p153
        $region30: #{hidden4_net.1} parent=11 // pred_check_branch
          %313 = sbr.rel (%p311) target = $region32
        $region31: #{hidden4_net.1} parent=11 // pred_region
          _
        $region32: #{hidden4_net.1} parent=11 // pred_fallthru
          _
        // Predicated region
        $region33: #{hidden4_net.1} parent=11 // pred_check
          %p314 = pneg %p174
        $region34: #{hidden4_net.1} parent=11 // pred_check_branch
          %316 = sbr.rel (%p314) target = $region36
        $region35: #{hidden4_net.1} parent=11 // pred_region
          _
        $region36: #{hidden4_net.1} parent=11 // pred_fallthru
          _
        // Predicated region
        $region37: #{hidden4_net.1} parent=11 // pred_check
          %p317 = pneg %p195
        $region38: #{hidden4_net.1} parent=11 // pred_check_branch
          %319 = sbr.rel (%p317) target = $region40
        $region39: #{hidden4_net.1} parent=11 // pred_region
          _
        $region40: #{hidden4_net.1} parent=11 // pred_fallthru
          _
        // Predicated region
        $region41: #{hidden4_net.1} parent=11 // pred_check
          %p320 = pneg %p216
        $region42: #{hidden4_net.1} parent=11 // pred_check_branch
          %322 = sbr.rel (%p320) target = $region44
        $region43: #{hidden4_net.1} parent=11 // pred_region
          _
        $region44: #{hidden4_net.1} parent=11 // pred_fallthru
          _
        // Predicated region
        $region45: #{hidden4_net.1} parent=11 // pred_check
          %p323 = pneg %p237
        $region46: #{hidden4_net.1} parent=11 // pred_check_branch
          %325 = sbr.rel (%p323) target = $region48
        $region47: #{hidden4_net.1} parent=11 // pred_region
          _
        $region48: #{hidden4_net.1} parent=11 // pred_fallthru
          _
        // Predicated region
        $region49: #{hidden4_net.1} parent=11 // pred_check
          %p326 = pneg %p258
        $region50: #{hidden4_net.1} parent=11 // pred_check_branch
          %328 = sbr.rel (%p326) target = $region52
        $region51: #{hidden4_net.1} parent=11 // pred_region
          _
        $region52: #{hidden4_net.1} parent=11 // pred_fallthru
          _
      $region12: #{hidden4_net.1} parent=5 // pred_fallthru
        _
      %p329 = scmp.lt.s32.totalorder %s22, 2
      // Predicated region
      $region53: #{hidden4_net.1} parent=5 // pred_check
        %p330 = pneg %p329
      $region54: #{hidden4_net.1} parent=5 // pred_check_branch
        %332 = sbr.rel (%p330) target = $region56
      $region55: #{hidden4_net.1} parent=5 // pred_region
        // Predicated region
        $region57: #{hidden4_net.1} parent=55 // pred_check
          %p333 = pneg %p42
        $region58: #{hidden4_net.1} parent=55 // pred_check_branch
          %335 = sbr.rel (%p333) target = $region60
        $region59: #{hidden4_net.1} parent=55 // pred_region
          %s336 = smul.u32 4, %s22
          %p337 = scmp.lt.s32.totalorder %s336, 7
          %s338 = scalar_select %p337, %s336, 7
          %s339 = smul.addr %s338, 2
          %s340 = scalar_lea.vmem %s0, %s339
          %s341 = smul.u32 4, %s22
        $region60: #{hidden4_net.1} parent=55 // pred_fallthru
          _
      $region56: #{hidden4_net.1} parent=5 // pred_fallthru
        _
      %p342 = scmp.le.s32.totalorder 1, %s22
      %p343 = scmp.lt.s32.totalorder %s22, 3
      %p344 = pnand %p342, %p343
      %p345 = pneg %p344
      // Predicated region
      $region61: #{hidden4_net.1} parent=5 // pred_check
        _
      $region62: #{hidden4_net.1} parent=5 // pred_check_branch
        %347 = sbr.rel (%p344) target = $region64
      $region63: #{hidden4_net.1} parent=5 // pred_region
        %s348 = ssub.s32 %s22, 1
        %s349 = smul.u32 4, %s27
        %p350 = scmp.lt.s32.totalorder %s349, 7
        %s351 = scalar_select %p350, %s349, 7
        %s352 = smul.addr %s351, 2
        %s353 = scalar_lea.vmem %s0, %s352
        %p354 = pneg %p48
        %p355 = pneg %p45
        %p356 = pneg %p69
        %p357 = pneg %p66
        %p358 = pneg %p90
        %p359 = pneg %p87
        %p360 = pneg %p111
        %p361 = pneg %p108
        %p362 = pneg %p132
        %p363 = pneg %p129
        %p364 = pneg %p153
        %p365 = pneg %p150
        %p366 = pneg %p174
        %p367 = pneg %p171
        %p368 = pneg %p195
        %p369 = pneg %p192
        %p370 = pneg %p216
        %p371 = pneg %p213
        %p372 = pneg %p237
        %p373 = pneg %p234
        %p374 = pneg %p258
        %p375 = pneg %p255
        %p376 = pneg %p284
        %p377 = pneg %p281
        %s378 = sand.u32 %s271, 1
        %s379 = scalar_lea.sflag [#allocation4], %s378
        %s380 = sand.u32 %s271, 1
        %s381 = smul.addr %s380, 4
        %s382 = scalar_lea.vmem [#allocation3], %s381
        %s383 = smul.u32 4, %s27
        %p384 = scmp.lt.s32.totalorder %s383, 7
        %s385 = scalar_select %p384, %s383, 7
        %s386 = smul.addr %s385, 2
        %s387 = scalar_lea.vmem %s0, %s386
        %s388 = smul.u32 4, %s27
        %s389 = smul.u32 4, %s27
        %v391 = vld [vmem:[%s387] sm:$0xff]
        %v392 = vld [vmem:[%s1] sm:$0xf]
        %v393 = vld [vmem:[%s1 + $0x4] sm:$0xf]
        %v394 = vld [vmem:[%s1 + $0x8] sm:$0xf]
        %v395 = vld [vmem:[%s1 + $0xc] sm:$0xf]
        %v396 = vld [vmem:[%s2] sm:$0xff]
        %v397 = vld [vmem:[%s2 + $0x8] sm:$0xff]
        %v398 = vld [vmem:[%s2 + $0x10] sm:$0xff]
        %v399 = vld [vmem:[%s2 + $0x18] sm:$0xff]
        %401 = vset.pattern.permute.xlu0 0
        %402 = vperm.xlu0 %401, %v396
        %v403 = vpop.permute.xlu0 %402
        %406 = vset.pattern.permute.xlu0 0
        %407 = vperm.xlu0 %406, %v397
        %v408 = vpop.permute.xlu0 %407
        %411 = vset.pattern.permute.xlu0 0
        %412 = vperm.xlu0 %411, %v398
        %v413 = vpop.permute.xlu0 %412
        %416 = vset.pattern.permute.xlu0 0
        %417 = vperm.xlu0 %416, %v399
        %v418 = vpop.permute.xlu0 %417
        %v424 = vunpack.c.l.b16 %v392
        %v425 = vunpack.c.l.b16 %v393
        %v426 = vunpack.c.l.b16 %v394
        %v427 = vunpack.c.l.b16 %v395
        %v428 = vpack.c.b16 %v425, %v424
        %v429 = vpack.c.b16 %v427, %v426
        %v431 = vcombine.high %v391, %v391
        %v433 = vunpack.c.l.s4 1983009808
        %v434 = vunpack.c.0.s8 %v433
        %v435 = vlaneseq
        %v436 = vshrl.u32 %v435, 7
        %v437 = vsub.s32 %v434, %v436
        %v438 = vrot.slane %v391, %v437
        %v440 = vunpack.c.l.s4 1983009808
        %v441 = vunpack.c.0.s8 %v440
        %v442 = vlaneseq
        %v443 = vshrl.u32 %v442, 7
        %v444 = vsub.s32 %v441, %v443
        %v445 = vrot.slane %v431, %v444
        %v446 = vcombine.high %v438, %v438
        %v447 = vcombine.high %v445, %v445
        %vm448 = vcmask 31744
        %v450 = vsel %vm448, %v428, 0
        %v453 = vsel %vm448, %v429, 0
        %vm455 = vcmask 1041408
        %v457 = vsel %vm455, %v438, 0
        %v460 = vsel %vm455, %v446, 0
        %v463 = vsel %vm455, %v445, 0
        %v466 = vsel %vm455, %v447, 0
        %468 = vmatprep.subr.bf16.mxu0 %v460
        %469 = vmatpush1.bf16.msra.mxu0 %v457
        %470 = vmatprep.subr.bf16.mxu0 0
        %471 = vmatpush1.bf16.msra.mxu0 0
        %472 = vmatprep.subr.bf16.mxu0 0
        %473 = vmatpush1.bf16.msra.mxu0 0
        %474 = vmatprep.subr.bf16.mxu0 0
        %475 = vmatpush1.bf16.msra.mxu0 0
        %476 = vmatprep.subr.bf16.mxu0 0
        %477 = vmatpush1.bf16.msra.mxu0 0
        %478 = vmatprep.subr.bf16.mxu0 0
        %479 = vmatpush1.bf16.msra.mxu0 0
        %480 = vmatprep.subr.bf16.mxu0 0
        %481 = vmatpush1.bf16.msra.mxu0 0
        %482 = vmatprep.subr.bf16.mxu0 0
        %483 = vmatpush1.bf16.msra.mxu0 0
        %484 = vmatprep.subr.bf16.mxu0 0
        %485 = vmatpush1.bf16.msra.mxu0 0
        %486 = vmatprep.subr.bf16.mxu0 0
        %487 = vmatpush1.bf16.msra.mxu0 0
        %488 = vmatprep.subr.bf16.mxu0 0
        %489 = vmatpush1.bf16.msra.mxu0 0
        %490 = vmatprep.subr.bf16.mxu0 0
        %491 = vmatpush1.bf16.msra.mxu0 0
        %492 = vmatprep.subr.bf16.mxu0 0
        %493 = vmatpush1.bf16.msra.mxu0 0
        %494 = vmatprep.subr.bf16.mxu0 0
        %495 = vmatpush1.bf16.msra.mxu0 0
        %496 = vmatprep.subr.bf16.mxu0 0
        %497 = vmatpush1.bf16.msra.mxu0 0
        %498 = vmatprep.subr.bf16.mxu0 0
        %499 = vmatpush1.bf16.msra.mxu0 0
        %500 = vmatprep.mubr.bf16.mxu0 0
        %501 = vmatmul.mubr.bf16.gmra.mrb[0].mxu0 %v450
        %v502 = vpop.f32.mrb[0].mxu0
        %v503 = vadd.f32 %v403, %v502
        %v504 = vpop.f32.mrb[0].mxu0
        %v505 = vadd.f32 %v403, %v504
        %v506 = vpop.f32.mrb[0].mxu0
        %v507 = vadd.f32 %v408, %v506
        %v508 = vpop.f32.mrb[0].mxu0
        %v509 = vadd.f32 %v408, %v508
        %510 = vmatprep.mubr.bf16.mxu0 0
        %511 = vmatmul.mubr.bf16.gmra.mrb[0].mxu0 %v453
        %v512 = vpop.f32.mrb[0].mxu0
        %v513 = vadd.f32 %v413, %v512
        %v514 = vpop.f32.mrb[0].mxu0
        %v515 = vadd.f32 %v413, %v514
        %v516 = vpop.f32.mrb[0].mxu0
        %v517 = vadd.f32 %v418, %v516
        %v518 = vpop.f32.mrb[0].mxu0
        %v519 = vadd.f32 %v418, %v518
        %520 = vdwg.mxu0
        %521 = vmatprep.subr.bf16.mxu0 %v466
        %522 = vmatpush1.bf16.msra.mxu0 %v463
        %523 = vmatprep.subr.bf16.mxu0 0
        %524 = vmatpush1.bf16.msra.mxu0 0
        %525 = vmatprep.subr.bf16.mxu0 0
        %526 = vmatpush1.bf16.msra.mxu0 0
        %527 = vmatprep.subr.bf16.mxu0 0
        %528 = vmatpush1.bf16.msra.mxu0 0
        %529 = vmatprep.subr.bf16.mxu0 0
        %530 = vmatpush1.bf16.msra.mxu0 0
        %531 = vmatprep.subr.bf16.mxu0 0
        %532 = vmatpush1.bf16.msra.mxu0 0
        %533 = vmatprep.subr.bf16.mxu0 0
        %534 = vmatpush1.bf16.msra.mxu0 0
        %535 = vmatprep.subr.bf16.mxu0 0
        %536 = vmatpush1.bf16.msra.mxu0 0
        %537 = vmatprep.subr.bf16.mxu0 0
        %538 = vmatpush1.bf16.msra.mxu0 0
        %539 = vmatprep.subr.bf16.mxu0 0
        %540 = vmatpush1.bf16.msra.mxu0 0
        %541 = vmatprep.subr.bf16.mxu0 0
        %542 = vmatpush1.bf16.msra.mxu0 0
        %543 = vmatprep.subr.bf16.mxu0 0
        %544 = vmatpush1.bf16.msra.mxu0 0
        %545 = vmatprep.subr.bf16.mxu0 0
        %546 = vmatpush1.bf16.msra.mxu0 0
        %547 = vmatprep.subr.bf16.mxu0 0
        %548 = vmatpush1.bf16.msra.mxu0 0
        %549 = vmatprep.subr.bf16.mxu0 0
        %550 = vmatpush1.bf16.msra.mxu0 0
        %551 = vmatprep.subr.bf16.mxu0 0
        %552 = vmatpush1.bf16.msra.mxu0 0
        %553 = vmatprep.mubr.bf16.mxu0 0
        %554 = vmatmul.mubr.bf16.gmra.mrb[0].mxu0 %v450
        %v555 = vpop.f32.mrb[0].mxu0
        %v556 = vadd.f32 %v403, %v555
        %v557 = vpop.f32.mrb[0].mxu0
        %v558 = vadd.f32 %v403, %v557
        %v559 = vpop.f32.mrb[0].mxu0
        %v560 = vadd.f32 %v408, %v559
        %v561 = vpop.f32.mrb[0].mxu0
        %v562 = vadd.f32 %v408, %v561
        %563 = vmatprep.mubr.bf16.mxu0 0
        %564 = vmatmul.mubr.bf16.gmra.mrb[0].mxu0 %v453
        %v565 = vpop.f32.mrb[0].mxu0
        %v566 = vadd.f32 %v413, %v565
        %v567 = vpop.f32.mrb[0].mxu0
        %v568 = vadd.f32 %v413, %v567
        %v569 = vpop.f32.mrb[0].mxu0
        %v570 = vadd.f32 %v418, %v569
        %v571 = vpop.f32.mrb[0].mxu0
        %v572 = vadd.f32 %v418, %v571
        %573 = vdwg.mxu0
        %v574 = vmax.f32 %v503, 0.0
        %v575 = vmax.f32 %v505, 0.0
        %v576 = vmax.f32 %v556, 0.0
        %v577 = vmax.f32 %v558, 0.0
        %v578 = vmax.f32 %v507, 0.0
        %v579 = vmax.f32 %v509, 0.0
        %v580 = vmax.f32 %v560, 0.0
        %v581 = vmax.f32 %v562, 0.0
        %v582 = vmax.f32 %v513, 0.0
        %v583 = vmax.f32 %v515, 0.0
        %v584 = vmax.f32 %v566, 0.0
        %v585 = vmax.f32 %v568, 0.0
        %v586 = vmax.f32 %v517, 0.0
        %v587 = vmax.f32 %v519, 0.0
        %v588 = vmax.f32 %v570, 0.0
        %v589 = vmax.f32 %v572, 0.0
        %v590 = vpack.c.bf16 %v578, %v574
        %v591 = vpack.c.bf16 %v579, %v575
        %v592 = vpack.c.bf16 %v580, %v576
        %v593 = vpack.c.bf16 %v581, %v577
        %v594 = vpack.c.bf16 %v586, %v582
        %v595 = vpack.c.bf16 %v587, %v583
        %v596 = vpack.c.bf16 %v588, %v584
        %v597 = vpack.c.bf16 %v589, %v585
        %v598 = vld [vmem:[%s3] sm:$0xf]
        %v599 = vld [vmem:[%s3 + $0x4] sm:$0xf]
        %v600 = vld [vmem:[%s3 + $0x8] sm:$0xf]
        %v601 = vld [vmem:[%s3 + $0xc] sm:$0xf]
        %v602 = vld [vmem:[%s4] sm:$0xff]
        %v603 = vld [vmem:[%s4 + $0x8] sm:$0xff]
        %v604 = vld [vmem:[%s4 + $0x10] sm:$0xff]
        %v605 = vld [vmem:[%s4 + $0x18] sm:$0xff]
        %607 = vset.pattern.permute.xlu0 0
        %608 = vperm.xlu0 %607, %v602
        %v609 = vpop.permute.xlu0 %608
        %612 = vset.pattern.permute.xlu0 0
        %613 = vperm.xlu0 %612, %v603
        %v614 = vpop.permute.xlu0 %613
        %617 = vset.pattern.permute.xlu0 0
        %618 = vperm.xlu0 %617, %v604
        %v619 = vpop.permute.xlu0 %618
        %622 = vset.pattern.permute.xlu0 0
        %623 = vperm.xlu0 %622, %v605
        %v624 = vpop.permute.xlu0 %623
        %v630 = vunpack.c.l.b16 %v598
        %v631 = vunpack.c.l.b16 %v599
        %v632 = vunpack.c.l.b16 %v600
        %v633 = vunpack.c.l.b16 %v601
        %v634 = vpack.c.b16 %v631, %v630
        %v635 = vpack.c.b16 %v633, %v632
        %vm636 = vcmask 261120
        %v638 = vsel %vm636, %v634, 0
        %v641 = vsel %vm636, %v635, 0
        %643 = vmatprep.subr.bf16.mxu0 %v591
        %644 = vmatpush1.bf16.msra.mxu0 %v590
        %645 = vmatprep.subr.bf16.mxu0 %v595
        %646 = vmatpush1.bf16.msra.mxu0 %v594
        %647 = vmatprep.subr.bf16.mxu0 0
        %648 = vmatpush1.bf16.msra.mxu0 0
        %649 = vmatprep.subr.bf16.mxu0 0
        %650 = vmatpush1.bf16.msra.mxu0 0
        %651 = vmatprep.subr.bf16.mxu0 0
        %652 = vmatpush1.bf16.msra.mxu0 0
        %653 = vmatprep.subr.bf16.mxu0 0
        %654 = vmatpush1.bf16.msra.mxu0 0
        %655 = vmatprep.subr.bf16.mxu0 0
        %656 = vmatpush1.bf16.msra.mxu0 0
        %657 = vmatprep.subr.bf16.mxu0 0
        %658 = vmatpush1.bf16.msra.mxu0 0
        %659 = vmatprep.subr.bf16.mxu0 0
        %660 = vmatpush1.bf16.msra.mxu0 0
        %661 = vmatprep.subr.bf16.mxu0 0
        %662 = vmatpush1.bf16.msra.mxu0 0
        %663 = vmatprep.subr.bf16.mxu0 0
        %664 = vmatpush1.bf16.msra.mxu0 0
        %665 = vmatprep.subr.bf16.mxu0 0
        %666 = vmatpush1.bf16.msra.mxu0 0
        %667 = vmatprep.subr.bf16.mxu0 0
        %668 = vmatpush1.bf16.msra.mxu0 0
        %669 = vmatprep.subr.bf16.mxu0 0
        %670 = vmatpush1.bf16.msra.mxu0 0
        %671 = vmatprep.subr.bf16.mxu0 0
        %672 = vmatpush1.bf16.msra.mxu0 0
        %673 = vmatprep.subr.bf16.mxu0 0
        %674 = vmatpush1.bf16.msra.mxu0 0
        %675 = vmatprep.mubr.bf16.mxu0 0
        %676 = vmatmul.mubr.bf16.gmra.mrb[0].mxu0 %v638
        %v677 = vpop.f32.mrb[0].mxu0
        %v678 = vadd.f32 %v609, %v677
        %v679 = vpop.f32.mrb[0].mxu0
        %v680 = vadd.f32 %v609, %v679
        %v681 = vpop.f32.mrb[0].mxu0
        %v682 = vadd.f32 %v614, %v681
        %v683 = vpop.f32.mrb[0].mxu0
        %v684 = vadd.f32 %v614, %v683
        %685 = vmatprep.mubr.bf16.mxu0 0
        %686 = vmatmul.mubr.bf16.gmra.mrb[0].mxu0 %v641
        %v687 = vpop.f32.mrb[0].mxu0
        %v688 = vadd.f32 %v619, %v687
        %v689 = vpop.f32.mrb[0].mxu0
        %v690 = vadd.f32 %v619, %v689
        %v691 = vpop.f32.mrb[0].mxu0
        %v692 = vadd.f32 %v624, %v691
        %v693 = vpop.f32.mrb[0].mxu0
        %v694 = vadd.f32 %v624, %v693
        %695 = vdwg.mxu0
        %696 = vmatprep.subr.bf16.mxu0 %v593
        %697 = vmatpush1.bf16.msra.mxu0 %v592
        %698 = vmatprep.subr.bf16.mxu0 %v597
        %699 = vmatpush1.bf16.msra.mxu0 %v596
        %700 = vmatprep.subr.bf16.mxu0 0
        %701 = vmatpush1.bf16.msra.mxu0 0
        %702 = vmatprep.subr.bf16.mxu0 0
        %703 = vmatpush1.bf16.msra.mxu0 0
        %704 = vmatprep.subr.bf16.mxu0 0
        %705 = vmatpush1.bf16.msra.mxu0 0
        %706 = vmatprep.subr.bf16.mxu0 0
        %707 = vmatpush1.bf16.msra.mxu0 0
        %708 = vmatprep.subr.bf16.mxu0 0
        %709 = vmatpush1.bf16.msra.mxu0 0
        %710 = vmatprep.subr.bf16.mxu0 0
        %711 = vmatpush1.bf16.msra.mxu0 0
        %712 = vmatprep.subr.bf16.mxu0 0
        %713 = vmatpush1.bf16.msra.mxu0 0
        %714 = vmatprep.subr.bf16.mxu0 0
        %715 = vmatpush1.bf16.msra.mxu0 0
        %716 = vmatprep.subr.bf16.mxu0 0
        %717 = vmatpush1.bf16.msra.mxu0 0
        %718 = vmatprep.subr.bf16.mxu0 0
        %719 = vmatpush1.bf16.msra.mxu0 0
        %720 = vmatprep.subr.bf16.mxu0 0
        %721 = vmatpush1.bf16.msra.mxu0 0
        %722 = vmatprep.subr.bf16.mxu0 0
        %723 = vmatpush1.bf16.msra.mxu0 0
        %724 = vmatprep.subr.bf16.mxu0 0
        %725 = vmatpush1.bf16.msra.mxu0 0
        %726 = vmatprep.subr.bf16.mxu0 0
        %727 = vmatpush1.bf16.msra.mxu0 0
        %728 = vmatprep.mubr.bf16.mxu0 0
        %729 = vmatmul.mubr.bf16.gmra.mrb[0].mxu0 %v638
        %v730 = vpop.f32.mrb[0].mxu0
        %v731 = vadd.f32 %v609, %v730
        %v732 = vpop.f32.mrb[0].mxu0
        %v733 = vadd.f32 %v609, %v732
        %v734 = vpop.f32.mrb[0].mxu0
        %v735 = vadd.f32 %v614, %v734
        %v736 = vpop.f32.mrb[0].mxu0
        %v737 = vadd.f32 %v614, %v736
        %738 = vmatprep.mubr.bf16.mxu0 0
        %739 = vmatmul.mubr.bf16.gmra.mrb[0].mxu0 %v641
        %v740 = vpop.f32.mrb[0].mxu0
        %v741 = vadd.f32 %v619, %v740
        %v742 = vpop.f32.mrb[0].mxu0
        %v743 = vadd.f32 %v619, %v742
        %v744 = vpop.f32.mrb[0].mxu0
        %v745 = vadd.f32 %v624, %v744
        %v746 = vpop.f32.mrb[0].mxu0
        %v747 = vadd.f32 %v624, %v746
        %748 = vdwg.mxu0
        %v749 = vmax.f32 %v678, 0.0
        %v750 = vmax.f32 %v680, 0.0
        %v751 = vmax.f32 %v731, 0.0
        %v752 = vmax.f32 %v733, 0.0
        %v753 = vmax.f32 %v682, 0.0
        %v754 = vmax.f32 %v684, 0.0
        %v755 = vmax.f32 %v735, 0.0
        %v756 = vmax.f32 %v737, 0.0
        %v757 = vmax.f32 %v688, 0.0
        %v758 = vmax.f32 %v690, 0.0
        %v759 = vmax.f32 %v741, 0.0
        %v760 = vmax.f32 %v743, 0.0
        %v761 = vmax.f32 %v692, 0.0
        %v762 = vmax.f32 %v694, 0.0
        %v763 = vmax.f32 %v745, 0.0
        %v764 = vmax.f32 %v747, 0.0
        %v765 = vpack.c.bf16 %v753, %v749
        %v766 = vpack.c.bf16 %v754, %v750
        %v767 = vpack.c.bf16 %v755, %v751
        %v768 = vpack.c.bf16 %v756, %v752
        %v769 = vpack.c.bf16 %v761, %v757
        %v770 = vpack.c.bf16 %v762, %v758
        %v771 = vpack.c.bf16 %v763, %v759
        %v772 = vpack.c.bf16 %v764, %v760
        %v773 = vld [vmem:[%s5] sm:$0xf]
        %v774 = vld [vmem:[%s5 + $0x4] sm:$0xf]
        %v775 = vld [vmem:[%s5 + $0x8] sm:$0xf]
        %v776 = vld [vmem:[%s5 + $0xc] sm:$0xf]
        %v777 = vld [vmem:[%s6] sm:$0xff]
        %v778 = vld [vmem:[%s6 + $0x8] sm:$0xff]
        %v779 = vld [vmem:[%s6 + $0x10] sm:$0xff]
        %v780 = vld [vmem:[%s6 + $0x18] sm:$0xff]
        %782 = vset.pattern.permute.xlu0 0
        %783 = vperm.xlu0 %782, %v777
        %v784 = vpop.permute.xlu0 %783
        %787 = vset.pattern.permute.xlu0 0
        %788 = vperm.xlu0 %787, %v778
        %v789 = vpop.permute.xlu0 %788
        %792 = vset.pattern.permute.xlu0 0
        %793 = vperm.xlu0 %792, %v779
        %v794 = vpop.permute.xlu0 %793
        %797 = vset.pattern.permute.xlu0 0
        %798 = vperm.xlu0 %797, %v780
        %v799 = vpop.permute.xlu0 %798
        %v805 = vunpack.c.l.b16 %v773
        %v806 = vunpack.c.l.b16 %v774
        %v807 = vunpack.c.l.b16 %v775
        %v808 = vunpack.c.l.b16 %v776
        %v809 = vpack.c.b16 %v806, %v805
        %v810 = vpack.c.b16 %v808, %v807
        %v812 = vsel %vm636, %v809, 0
        %v815 = vsel %vm636, %v810, 0
        %817 = vmatprep.subr.bf16.mxu0 %v766
        %818 = vmatpush1.bf16.msra.mxu0 %v765
        %819 = vmatprep.subr.bf16.mxu0 %v770
        %820 = vmatpush1.bf16.msra.mxu0 %v769
        %821 = vmatprep.subr.bf16.mxu0 0
        %822 = vmatpush1.bf16.msra.mxu0 0
        %823 = vmatprep.subr.bf16.mxu0 0
        %824 = vmatpush1.bf16.msra.mxu0 0
        %825 = vmatprep.subr.bf16.mxu0 0
        %826 = vmatpush1.bf16.msra.mxu0 0
        %827 = vmatprep.subr.bf16.mxu0 0
        %828 = vmatpush1.bf16.msra.mxu0 0
        %829 = vmatprep.subr.bf16.mxu0 0
        %830 = vmatpush1.bf16.msra.mxu0 0
        %831 = vmatprep.subr.bf16.mxu0 0
        %832 = vmatpush1.bf16.msra.mxu0 0
        %833 = vmatprep.subr.bf16.mxu0 0
        %834 = vmatpush1.bf16.msra.mxu0 0
        %835 = vmatprep.subr.bf16.mxu0 0
        %836 = vmatpush1.bf16.msra.mxu0 0
        %837 = vmatprep.subr.bf16.mxu0 0
        %838 = vmatpush1.bf16.msra.mxu0 0
        %839 = vmatprep.subr.bf16.mxu0 0
        %840 = vmatpush1.bf16.msra.mxu0 0
        %841 = vmatprep.subr.bf16.mxu0 0
        %842 = vmatpush1.bf16.msra.mxu0 0
        %843 = vmatprep.subr.bf16.mxu0 0
        %844 = vmatpush1.bf16.msra.mxu0 0
        %845 = vmatprep.subr.bf16.mxu0 0
        %846 = vmatpush1.bf16.msra.mxu0 0
        %847 = vmatprep.subr.bf16.mxu0 0
        %848 = vmatpush1.bf16.msra.mxu0 0
        %849 = vmatprep.mubr.bf16.mxu0 0
        %850 = vmatmul.mubr.bf16.gmra.mrb[0].mxu0 %v812
        %v851 = vpop.f32.mrb[0].mxu0
        %v852 = vadd.f32 %v784, %v851
        %v853 = vpop.f32.mrb[0].mxu0
        %v854 = vadd.f32 %v784, %v853
        %v855 = vpop.f32.mrb[0].mxu0
        %v856 = vadd.f32 %v789, %v855
        %v857 = vpop.f32.mrb[0].mxu0
        %v858 = vadd.f32 %v789, %v857
        %859 = vmatprep.mubr.bf16.mxu0 0
        %860 = vmatmul.mubr.bf16.gmra.mrb[0].mxu0 %v815
        %v861 = vpop.f32.mrb[0].mxu0
        %v862 = vadd.f32 %v794, %v861
        %v863 = vpop.f32.mrb[0].mxu0
        %v864 = vadd.f32 %v794, %v863
        %v865 = vpop.f32.mrb[0].mxu0
        %v866 = vadd.f32 %v799, %v865
        %v867 = vpop.f32.mrb[0].mxu0
        %v868 = vadd.f32 %v799, %v867
        %869 = vdwg.mxu0
        %870 = vmatprep.subr.bf16.mxu0 %v768
        %871 = vmatpush1.bf16.msra.mxu0 %v767
        %872 = vmatprep.subr.bf16.mxu0 %v772
        %873 = vmatpush1.bf16.msra.mxu0 %v771
        %874 = vmatprep.subr.bf16.mxu0 0
        %875 = vmatpush1.bf16.msra.mxu0 0
        %876 = vmatprep.subr.bf16.mxu0 0
        %877 = vmatpush1.bf16.msra.mxu0 0
        %878 = vmatprep.subr.bf16.mxu0 0
        %879 = vmatpush1.bf16.msra.mxu0 0
        %880 = vmatprep.subr.bf16.mxu0 0
        %881 = vmatpush1.bf16.msra.mxu0 0
        %882 = vmatprep.subr.bf16.mxu0 0
        %883 = vmatpush1.bf16.msra.mxu0 0
        %884 = vmatprep.subr.bf16.mxu0 0
        %885 = vmatpush1.bf16.msra.mxu0 0
        %886 = vmatprep.subr.bf16.mxu0 0
        %887 = vmatpush1.bf16.msra.mxu0 0
        %888 = vmatprep.subr.bf16.mxu0 0
        %889 = vmatpush1.bf16.msra.mxu0 0
        %890 = vmatprep.subr.bf16.mxu0 0
        %891 = vmatpush1.bf16.msra.mxu0 0
        %892 = vmatprep.subr.bf16.mxu0 0
        %893 = vmatpush1.bf16.msra.mxu0 0
        %894 = vmatprep.subr.bf16.mxu0 0
        %895 = vmatpush1.bf16.msra.mxu0 0
        %896 = vmatprep.subr.bf16.mxu0 0
        %897 = vmatpush1.bf16.msra.mxu0 0
        %898 = vmatprep.subr.bf16.mxu0 0
        %899 = vmatpush1.bf16.msra.mxu0 0
        %900 = vmatprep.subr.bf16.mxu0 0
        %901 = vmatpush1.bf16.msra.mxu0 0
        %902 = vmatprep.mubr.bf16.mxu0 0
        %903 = vmatmul.mubr.bf16.gmra.mrb[0].mxu0 %v812
        %v904 = vpop.f32.mrb[0].mxu0
        %v905 = vadd.f32 %v784, %v904
        %v906 = vpop.f32.mrb[0].mxu0
        %v907 = vadd.f32 %v784, %v906
        %v908 = vpop.f32.mrb[0].mxu0
        %v909 = vadd.f32 %v789, %v908
        %v910 = vpop.f32.mrb[0].mxu0
        %v911 = vadd.f32 %v789, %v910
        %912 = vmatprep.mubr.bf16.mxu0 0
        %913 = vmatmul.mubr.bf16.gmra.mrb[0].mxu0 %v815
        %v914 = vpop.f32.mrb[0].mxu0
        %v915 = vadd.f32 %v794, %v914
        %v916 = vpop.f32.mrb[0].mxu0
        %v917 = vadd.f32 %v794, %v916
        %v918 = vpop.f32.mrb[0].mxu0
        %v919 = vadd.f32 %v799, %v918
        %v920 = vpop.f32.mrb[0].mxu0
        %v921 = vadd.f32 %v799, %v920
        %922 = vdwg.mxu0
        %v923 = vmax.f32 %v852, 0.0
        %v924 = vmax.f32 %v854, 0.0
        %v925 = vmax.f32 %v905, 0.0
        %v926 = vmax.f32 %v907, 0.0
        %v927 = vmax.f32 %v856, 0.0
        %v928 = vmax.f32 %v858, 0.0
        %v929 = vmax.f32 %v909, 0.0
        %v930 = vmax.f32 %v911, 0.0
        %v931 = vmax.f32 %v862, 0.0
        %v932 = vmax.f32 %v864, 0.0
        %v933 = vmax.f32 %v915, 0.0
        %v934 = vmax.f32 %v917, 0.0
        %v935 = vmax.f32 %v866, 0.0
        %v936 = vmax.f32 %v868, 0.0
        %v937 = vmax.f32 %v919, 0.0
        %v938 = vmax.f32 %v921, 0.0
        %v939 = vpack.c.bf16 %v927, %v923
        %v940 = vpack.c.bf16 %v928, %v924
        %v941 = vpack.c.bf16 %v929, %v925
        %v942 = vpack.c.bf16 %v930, %v926
        %v943 = vpack.c.bf16 %v935, %v931
        %v944 = vpack.c.bf16 %v936, %v932
        %v945 = vpack.c.bf16 %v937, %v933
        %v946 = vpack.c.bf16 %v938, %v934
        %v947 = vld [vmem:[%s7] sm:$0xf]
        %v948 = vld [vmem:[%s7 + $0x4] sm:$0xf]
        %v949 = vld [vmem:[%s7 + $0x8] sm:$0xf]
        %v950 = vld [vmem:[%s7 + $0xc] sm:$0xf]
        %v951 = vld [vmem:[%s8] sm:$0xff]
        %v952 = vld [vmem:[%s8 + $0x8] sm:$0xff]
        %v953 = vld [vmem:[%s8 + $0x10] sm:$0xff]
        %v954 = vld [vmem:[%s8 + $0x18] sm:$0xff]
        %956 = vset.pattern.permute.xlu0 0
        %957 = vperm.xlu0 %956, %v951
        %v958 = vpop.permute.xlu0 %957
        %961 = vset.pattern.permute.xlu0 0
        %962 = vperm.xlu0 %961, %v952
        %v963 = vpop.permute.xlu0 %962
        %966 = vset.pattern.permute.xlu0 0
        %967 = vperm.xlu0 %966, %v953
        %v968 = vpop.permute.xlu0 %967
        %971 = vset.pattern.permute.xlu0 0
        %972 = vperm.xlu0 %971, %v954
        %v973 = vpop.permute.xlu0 %972
        %v979 = vunpack.c.l.b16 %v947
        %v980 = vunpack.c.l.b16 %v948
        %v981 = vunpack.c.l.b16 %v949
        %v982 = vunpack.c.l.b16 %v950
        %v983 = vpack.c.b16 %v980, %v979
        %v984 = vpack.c.b16 %v982, %v981
        %v986 = vsel %vm636, %v983, 0
        %v989 = vsel %vm636, %v984, 0
        %991 = vmatprep.subr.bf16.mxu0 %v940
        %992 = vmatpush1.bf16.msra.mxu0 %v939
        %993 = vmatprep.subr.bf16.mxu0 %v944
        %994 = vmatpush1.bf16.msra.mxu0 %v943
        %995 = vmatprep.subr.bf16.mxu0 0
        %996 = vmatpush1.bf16.msra.mxu0 0
        %997 = vmatprep.subr.bf16.mxu0 0
        %998 = vmatpush1.bf16.msra.mxu0 0
        %999 = vmatprep.subr.bf16.mxu0 0
        %1000 = vmatpush1.bf16.msra.mxu0 0
        %1001 = vmatprep.subr.bf16.mxu0 0
        %1002 = vmatpush1.bf16.msra.mxu0 0
        %1003 = vmatprep.subr.bf16.mxu0 0
        %1004 = vmatpush1.bf16.msra.mxu0 0
        %1005 = vmatprep.subr.bf16.mxu0 0
        %1006 = vmatpush1.bf16.msra.mxu0 0
        %1007 = vmatprep.subr.bf16.mxu0 0
        %1008 = vmatpush1.bf16.msra.mxu0 0
        %1009 = vmatprep.subr.bf16.mxu0 0
        %1010 = vmatpush1.bf16.msra.mxu0 0
        %1011 = vmatprep.subr.bf16.mxu0 0
        %1012 = vmatpush1.bf16.msra.mxu0 0
        %1013 = vmatprep.subr.bf16.mxu0 0
        %1014 = vmatpush1.bf16.msra.mxu0 0
        %1015 = vmatprep.subr.bf16.mxu0 0
        %1016 = vmatpush1.bf16.msra.mxu0 0
        %1017 = vmatprep.subr.bf16.mxu0 0
        %1018 = vmatpush1.bf16.msra.mxu0 0
        %1019 = vmatprep.subr.bf16.mxu0 0
        %1020 = vmatpush1.bf16.msra.mxu0 0
        %1021 = vmatprep.subr.bf16.mxu0 0
        %1022 = vmatpush1.bf16.msra.mxu0 0
        %1023 = vmatprep.mubr.bf16.mxu0 0
        %1024 = vmatmul.mubr.bf16.gmra.mrb[0].mxu0 %v986
        %v1025 = vpop.f32.mrb[0].mxu0
        %v1026 = vadd.f32 %v958, %v1025
        %v1027 = vpop.f32.mrb[0].mxu0
        %v1028 = vadd.f32 %v958, %v1027
        %v1029 = vpop.f32.mrb[0].mxu0
        %v1030 = vadd.f32 %v963, %v1029
        %v1031 = vpop.f32.mrb[0].mxu0
        %v1032 = vadd.f32 %v963, %v1031
        %1033 = vmatprep.mubr.bf16.mxu0 0
        %1034 = vmatmul.mubr.bf16.gmra.mrb[0].mxu0 %v989
        %v1035 = vpop.f32.mrb[0].mxu0
        %v1036 = vadd.f32 %v968, %v1035
        %v1037 = vpop.f32.mrb[0].mxu0
        %v1038 = vadd.f32 %v968, %v1037
        %v1039 = vpop.f32.mrb[0].mxu0
        %v1040 = vadd.f32 %v973, %v1039
        %v1041 = vpop.f32.mrb[0].mxu0
        %v1042 = vadd.f32 %v973, %v1041
        %1043 = vdwg.mxu0
        %1044 = vmatprep.subr.bf16.mxu0 %v942
        %1045 = vmatpush1.bf16.msra.mxu0 %v941
        %1046 = vmatprep.subr.bf16.mxu0 %v946
        %1047 = vmatpush1.bf16.msra.mxu0 %v945
        %1048 = vmatprep.subr.bf16.mxu0 0
        %1049 = vmatpush1.bf16.msra.mxu0 0
        %1050 = vmatprep.subr.bf16.mxu0 0
        %1051 = vmatpush1.bf16.msra.mxu0 0
        %1052 = vmatprep.subr.bf16.mxu0 0
        %1053 = vmatpush1.bf16.msra.mxu0 0
        %1054 = vmatprep.subr.bf16.mxu0 0
        %1055 = vmatpush1.bf16.msra.mxu0 0
        %1056 = vmatprep.subr.bf16.mxu0 0
        %1057 = vmatpush1.bf16.msra.mxu0 0
        %1058 = vmatprep.subr.bf16.mxu0 0
        %1059 = vmatpush1.bf16.msra.mxu0 0
        %1060 = vmatprep.subr.bf16.mxu0 0
        %1061 = vmatpush1.bf16.msra.mxu0 0
        %1062 = vmatprep.subr.bf16.mxu0 0
        %1063 = vmatpush1.bf16.msra.mxu0 0
        %1064 = vmatprep.subr.bf16.mxu0 0
        %1065 = vmatpush1.bf16.msra.mxu0 0
        %1066 = vmatprep.subr.bf16.mxu0 0
        %1067 = vmatpush1.bf16.msra.mxu0 0
        %1068 = vmatprep.subr.bf16.mxu0 0
        %1069 = vmatpush1.bf16.msra.mxu0 0
        %1070 = vmatprep.subr.bf16.mxu0 0
        %1071 = vmatpush1.bf16.msra.mxu0 0
        %1072 = vmatprep.subr.bf16.mxu0 0
        %1073 = vmatpush1.bf16.msra.mxu0 0
        %1074 = vmatprep.subr.bf16.mxu0 0
        %1075 = vmatpush1.bf16.msra.mxu0 0
        %1076 = vmatprep.mubr.bf16.mxu0 0
        %1077 = vmatmul.mubr.bf16.gmra.mrb[0].mxu0 %v986
        %v1078 = vpop.f32.mrb[0].mxu0
        %v1079 = vadd.f32 %v958, %v1078
        %v1080 = vpop.f32.mrb[0].mxu0
        %v1081 = vadd.f32 %v958, %v1080
        %v1082 = vpop.f32.mrb[0].mxu0
        %v1083 = vadd.f32 %v963, %v1082
        %v1084 = vpop.f32.mrb[0].mxu0
        %v1085 = vadd.f32 %v963, %v1084
        %1086 = vmatprep.mubr.bf16.mxu0 0
        %1087 = vmatmul.mubr.bf16.gmra.mrb[0].mxu0 %v989
        %v1088 = vpop.f32.mrb[0].mxu0
        %v1089 = vadd.f32 %v968, %v1088
        %v1090 = vpop.f32.mrb[0].mxu0
        %v1091 = vadd.f32 %v968, %v1090
        %v1092 = vpop.f32.mrb[0].mxu0
        %v1093 = vadd.f32 %v973, %v1092
        %v1094 = vpop.f32.mrb[0].mxu0
        %v1095 = vadd.f32 %v973, %v1094
        %1096 = vdwg.mxu0
        %v1097 = vmax.f32 %v1026, 0.0
        %v1098 = vmax.f32 %v1028, 0.0
        %v1099 = vmax.f32 %v1079, 0.0
        %v1100 = vmax.f32 %v1081, 0.0
        %v1101 = vmax.f32 %v1030, 0.0
        %v1102 = vmax.f32 %v1032, 0.0
        %v1103 = vmax.f32 %v1083, 0.0
        %v1104 = vmax.f32 %v1085, 0.0
        %v1105 = vmax.f32 %v1036, 0.0
        %v1106 = vmax.f32 %v1038, 0.0
        %v1107 = vmax.f32 %v1089, 0.0
        %v1108 = vmax.f32 %v1091, 0.0
        %v1109 = vmax.f32 %v1040, 0.0
        %v1110 = vmax.f32 %v1042, 0.0
        %v1111 = vmax.f32 %v1093, 0.0
        %v1112 = vmax.f32 %v1095, 0.0
        %v1113 = vpack.c.bf16 %v1101, %v1097
        %v1114 = vpack.c.bf16 %v1102, %v1098
        %v1115 = vpack.c.bf16 %v1103, %v1099
        %v1116 = vpack.c.bf16 %v1104, %v1100
        %v1117 = vpack.c.bf16 %v1109, %v1105
        %v1118 = vpack.c.bf16 %v1110, %v1106
        %v1119 = vpack.c.bf16 %v1111, %v1107
        %v1120 = vpack.c.bf16 %v1112, %v1108
        %v1121 = vld [vmem:[%s9] sm:$0x1]
        %v1122 = vld [vmem:[#allocation2] sm:$0x1]
        %1124 = vset.pattern.permute.xlu0 0
        %1125 = vperm.xlu0 %1124, %v1122
        %v1126 = vpop.permute.xlu0 %1125
        %v1128 = vlaneseq
        %v1129 = vshrl.u32 %v1128, 7
        %v1130 = vsub.s32 0, %v1129
        %v1131 = vrot.slane %v1126, %v1130
        %v1133 = vsel %vm636, %v1121, 0
        %1135 = vmatprep.subr.bf16.mxu0 %v1114
        %1136 = vmatpush1.bf16.msra.mxu0 %v1113
        %1137 = vmatprep.subr.bf16.mxu0 %v1118
        %1138 = vmatpush1.bf16.msra.mxu0 %v1117
        %1139 = vmatprep.subr.bf16.mxu0 0
        %1140 = vmatpush1.bf16.msra.mxu0 0
        %1141 = vmatprep.subr.bf16.mxu0 0
        %1142 = vmatpush1.bf16.msra.mxu0 0
        %1143 = vmatprep.subr.bf16.mxu0 0
        %1144 = vmatpush1.bf16.msra.mxu0 0
        %1145 = vmatprep.subr.bf16.mxu0 0
        %1146 = vmatpush1.bf16.msra.mxu0 0
        %1147 = vmatprep.subr.bf16.mxu0 0
        %1148 = vmatpush1.bf16.msra.mxu0 0
        %1149 = vmatprep.subr.bf16.mxu0 0
        %1150 = vmatpush1.bf16.msra.mxu0 0
        %1151 = vmatprep.subr.bf16.mxu0 0
        %1152 = vmatpush1.bf16.msra.mxu0 0
        %1153 = vmatprep.subr.bf16.mxu0 0
        %1154 = vmatpush1.bf16.msra.mxu0 0
        %1155 = vmatprep.subr.bf16.mxu0 0
        %1156 = vmatpush1.bf16.msra.mxu0 0
        %1157 = vmatprep.subr.bf16.mxu0 0
        %1158 = vmatpush1.bf16.msra.mxu0 0
        %1159 = vmatprep.subr.bf16.mxu0 0
        %1160 = vmatpush1.bf16.msra.mxu0 0
        %1161 = vmatprep.subr.bf16.mxu0 0
        %1162 = vmatpush1.bf16.msra.mxu0 0
        %1163 = vmatprep.subr.bf16.mxu0 0
        %1164 = vmatpush1.bf16.msra.mxu0 0
        %1165 = vmatprep.subr.bf16.mxu0 0
        %1166 = vmatpush1.bf16.msra.mxu0 0
        %1167 = vmatprep.mubr.bf16.mxu0 0
        %1168 = vmatmul.mubr.bf16.gmra.mrb[0].mxu0 %v1133
        %v1169 = vpop.f32.mrb[0].mxu0
        %v1170 = vadd.f32 %v1131, %v1169
        %v1171 = vpop.f32.mrb[0].mxu0
        %v1172 = vadd.f32 %v1131, %v1171
        %v1173 = vpop.f32.mrb[0].mxu0
        %v1174 = vpop.f32.mrb[0].mxu0
        %1175 = vdwg.mxu0
        %1176 = vmatprep.subr.bf16.mxu0 %v1116
        %1177 = vmatpush1.bf16.msra.mxu0 %v1115
        %1178 = vmatprep.subr.bf16.mxu0 %v1120
        %1179 = vmatpush1.bf16.msra.mxu0 %v1119
        %1180 = vmatprep.subr.bf16.mxu0 0
        %1181 = vmatpush1.bf16.msra.mxu0 0
        %1182 = vmatprep.subr.bf16.mxu0 0
        %1183 = vmatpush1.bf16.msra.mxu0 0
        %1184 = vmatprep.subr.bf16.mxu0 0
        %1185 = vmatpush1.bf16.msra.mxu0 0
        %1186 = vmatprep.subr.bf16.mxu0 0
        %1187 = vmatpush1.bf16.msra.mxu0 0
        %1188 = vmatprep.subr.bf16.mxu0 0
        %1189 = vmatpush1.bf16.msra.mxu0 0
        %1190 = vmatprep.subr.bf16.mxu0 0
        %1191 = vmatpush1.bf16.msra.mxu0 0
        %1192 = vmatprep.subr.bf16.mxu0 0
        %1193 = vmatpush1.bf16.msra.mxu0 0
        %1194 = vmatprep.subr.bf16.mxu0 0
        %1195 = vmatpush1.bf16.msra.mxu0 0
        %1196 = vmatprep.subr.bf16.mxu0 0
        %1197 = vmatpush1.bf16.msra.mxu0 0
        %1198 = vmatprep.subr.bf16.mxu0 0
        %1199 = vmatpush1.bf16.msra.mxu0 0
        %1200 = vmatprep.subr.bf16.mxu0 0
        %1201 = vmatpush1.bf16.msra.mxu0 0
        %1202 = vmatprep.subr.bf16.mxu0 0
        %1203 = vmatpush1.bf16.msra.mxu0 0
        %1204 = vmatprep.subr.bf16.mxu0 0
        %1205 = vmatpush1.bf16.msra.mxu0 0
        %1206 = vmatprep.subr.bf16.mxu0 0
        %1207 = vmatpush1.bf16.msra.mxu0 0
        %1208 = vmatprep.mubr.bf16.mxu0 0
        %1209 = vmatmul.mubr.bf16.gmra.mrb[0].mxu0 %v1133
        %v1210 = vpop.f32.mrb[0].mxu0
        %v1211 = vadd.f32 %v1131, %v1210
        %v1212 = vpop.f32.mrb[0].mxu0
        %v1213 = vadd.f32 %v1131, %v1212
        %v1214 = vpop.f32.mrb[0].mxu0
        %v1215 = vpop.f32.mrb[0].mxu0
        %1216 = vdwg.mxu0
        %v1217 = vmax.f32 %v1170, 0.0
        %v1218 = vmax.f32 %v1172, 0.0
        %v1219 = vmax.f32 %v1211, 0.0
        %v1220 = vmax.f32 %v1213, 0.0
        %v1225 = vcombine.low %v1217, %v1218
        %v1226 = vcombine.low %v1219, %v1220
        %v1228 = vunpack.c.l.s4 1966171168
        %v1229 = vunpack.c.0.s8 %v1228
        %v1230 = vlaneseq
        %v1231 = vshrl.u32 %v1230, 7
        %v1232 = vsub.s32 %v1229, %v1231
        %v1233 = vrot.slane %v1225, %v1232
        %v1235 = vunpack.c.l.s4 1966171168
        %v1236 = vunpack.c.0.s8 %v1235
        %v1237 = vlaneseq
        %v1238 = vshrl.u32 %v1237, 7
        %v1239 = vsub.s32 %v1236, %v1238
        %v1240 = vrot.slane %v1226, %v1239
        %v1241 = vcombine.low %v1233, %v1240
        %v1243 = vunpack.c.l.s4 1966171168
        %v1244 = vunpack.c.0.s8 %v1243
        %v1245 = vlaneseq
        %v1246 = vshrl.u32 %v1245, 7
        %v1247 = vsub.s32 %v1244, %v1246
        %v1248 = vrot.slane %v1241, %v1247
        %v1250 = vlaneseq
        %vm1251 = vcmp.ge.s32.totalorder %v1250, 0
        %vm1252 = vcmp.lt.s32.totalorder %v1250, 512
        %vm1253 = vmand %vm1251, %vm1252
        %1254 = vst.msk [vmem:[%s382] sm:$0xf] %vm1253, %v1248
        %s1255 = sand.u32 %s271, 1
        %s1256 = scalar_lea.sflag [#allocation4], %s1255
        %s1257 = sand.u32 %s271, 1
        %s1258 = smul.addr %s1257, 4
        %s1259 = scalar_lea.vmem [#allocation3], %s1258
        // Predicated region
        $region65: #{hidden4_net.1} parent=63 // pred_check
          %p1260 = pneg %p281
        $region66: #{hidden4_net.1} parent=63 // pred_check_branch
          %1262 = sbr.rel (%p1260) target = $region68
        $region67: #{hidden4_net.1} parent=63 // pred_region
          %s1263 = smul.u32 4, %s27
          %s1265 = ssub.s32 64, 64
          %1266 = vsyncadd %s1256, %s1265
          %s1267 = smul.addr %s1263, 16
          %s1268 = scalar_lea.hbm %s11, %s1267
          %s1270 = sshll.u32 %s1259, 4
          %s1271 = int_to_ptr.vmem [resolvable:$true] %s1270
          %1273 = dma.vmem_to_hbm [thread:$0]  %s1271, 64, %s1268, %s1256
        $region68: #{hidden4_net.1} parent=63 // pred_fallthru
          _
      $region64: #{hidden4_net.1} parent=5 // pred_fallthru
        _
      %p1274 = scmp.le.s32.totalorder 2, %s22
      // Predicated region
      $region69: #{hidden4_net.1} parent=5 // pred_check
        %p1275 = pneg %p1274
      $region70: #{hidden4_net.1} parent=5 // pred_check_branch
        %1277 = sbr.rel (%p1275) target = $region72
      $region71: #{hidden4_net.1} parent=5 // pred_region
        %s1278 = ssub.s32 %s22, 2
        // Predicated region
        $region73: #{hidden4_net.1} parent=71 // pred_check
          %p1279 = pneg %p287
        $region74: #{hidden4_net.1} parent=71 // pred_check_branch
          %1281 = sbr.rel (%p1279) target = $region76
        $region75: #{hidden4_net.1} parent=71 // pred_region
          %s1282 = sand.u32 %s272, 1
          %s1283 = scalar_lea.sflag [#allocation4], %s1282
          %s1284 = sand.u32 %s272, 1
          %s1285 = smul.addr %s1284, 4
          %s1286 = scalar_lea.vmem [#allocation3], %s1285
          %1287 = dma.done %s1283, 64
        $region76: #{hidden4_net.1} parent=71 // pred_fallthru
          _
      $region72: #{hidden4_net.1} parent=5 // pred_fallthru
        _
    $region6: #{hidden4_net.1} parent=1 // loop_footer
      %s26 = sadd.s32 1, %s22
    $region7: #{hidden4_net.1} parent=1 // loop_footer_branch
      %21 = sbr.rel target = $region3
    $region8: #{hidden4_net.1} parent=1 // loop_exit
      _
    %1288 = vsyncpa [#allocation4], 1
    %s1289 = scalar_lea.sflag [#allocation4], 1
    %1290 = vsyncpa %s1289, 1

</llo_original>
